<compile_context>
chip_gen: v5e
topology: v5e:2x2
jax: 0.10.0
libtpu: 0.0.40
codegen_flags: <defaults>
</compile_context>

<pallas_src>
import functools

import jax
import jax.numpy as jnp
import numpy as np
from jax.experimental import pallas as pl
from jax.experimental.pallas import tpu as pltpu


def _round_up(n, m):
    return ((n + m - 1) // m) * m


def _fused_value_kernel(x_ref, w1_ref, b1_ref, w2_ref, b2_ref, o_ref):
    """One batch tile of: out = relu(x @ W1^T + b1) @ W2^T + b2 (eval-mode dropout).

    x_ref : (bm, D)      activation tile (streams per grid step; f32 or bf16)
    w1_ref: (D, H)       fc1 weight, pre-transposed (VMEM-resident across the grid)
    b1_ref: (1, H)       fc1 bias (f32)
    w2_ref: (1, H)       fc2 weight row (f32) — scalar value head (O == 1)
    b2_ref: (1, 1)       fc2 bias (f32)
    o_ref : (..., bm)    lane-dense output row for this tile
    """
    # fc1 on the MXU with f32 accumulation; bias + ReLU on full lane-dense vregs.
    h = jnp.dot(x_ref[...], w1_ref[...], preferred_element_type=jnp.float32)
    h = jnp.maximum(h + b1_ref[...], 0.0)
    # Dropout(p=0.1) is identity at inference.
    # TODO(synk): training-mode dropout would need pltpu.prng_seed/prng_random_bits
    #             plus 1/(1-p) rescaling.

    # fc2 (H -> 1): VPU multiply + lane (XLU) reduction instead of a nearly-empty
    # MXU pass; result is produced directly as a lane-dense row so the store and
    # HBM writeback are contiguous.
    y = jnp.sum(h * w2_ref[...], axis=-1)          # (bm,)
    y = y[None, :] + b2_ref[...]                   # (1, bm)
    o_ref[...] = y.reshape(o_ref.shape).astype(o_ref.dtype)


def prepare_params(params, *, matmul_dtype=jnp.float32):
    """One-time parameter preprocessing (hoisted out of the per-call path).

    params = (w1, b1, w2, b2) in PyTorch nn.Linear layout:
        w1: (H, D), b1: (H,), w2: (O, H), b2: (O,)   with O == 1.
    Use matmul_dtype=jnp.bfloat16 for native-MXU throughput and halved activation
    DMA bytes (accumulation / bias / ReLU / fc2 stay in f32).
    """
    w1, b1, w2, b2 = params
    H, D = w1.shape
    O = w2.shape[0]
    if O != 1:
        raise NotImplementedError("kernel is specialised for a scalar value head (output_dim == 1)")
    w1t = jnp.asarray(w1).T.astype(matmul_dtype)               # (D, H)
    b1r = jnp.asarray(b1).reshape(1, H).astype(jnp.float32)    # (1, H)
    w2r = jnp.asarray(w2).reshape(1, H).astype(jnp.float32)    # (1, H)
    b2r = jnp.asarray(b2).reshape(1, 1).astype(jnp.float32)    # (1, 1)
    return w1t, b1r, w2r, b2r


@functools.partial(jax.jit, static_argnames=("bm",))
def value_network_forward(ht, prepared_params, *, bm=512):
    """ht: (B, input_dim). prepared_params = prepare_params(...). Returns (B, 1) f32."""
    w1t, b1r, w2r, b2r = prepared_params
    B, D = ht.shape
    Dw, H = w1t.shape
    assert D == Dw, "input_dim mismatch between ht and fc1 weight"

    x = jnp.asarray(ht).astype(w1t.dtype)          # matmul dtype (f32 or bf16)

    # Batch tile: as large as the (padded) batch allows, kept a multiple of 8.
    bm_eff = _round_up(min(bm, _round_up(B, 8)), 8)
    Bp = _round_up(B, bm_eff)
    # TODO(synk): a masked tail tile would avoid this pad copy when B % bm_eff != 0.
    if Bp != B:
        x = jnp.pad(x, ((0, Bp - B), (0, 0)))
    num_tiles = Bp // bm_eff

    if num_tiles == 1:
        # Small-batch path: whole problem in one un-pipelined block (no grid,
        # no per-step pipeline prologue/epilogue).
        out = pl.pallas_call(
            _fused_value_kernel,
            out_shape=jax.ShapeDtypeStruct((1, bm_eff), jnp.float32),
        )(x, w1t, b1r, w2r, b2r)
    else:
        # Streaming path: activation tiles stream through VMEM; weights/biases are
        # grid-invariant (DMA'd once, VMEM-resident). "parallel" lets the two
        # TensorCores on v7x split the batch tiles.
        out = pl.pallas_call(
            _fused_value_kernel,
            out_shape=jax.ShapeDtypeStruct((num_tiles, 1, bm_eff), jnp.float32),
            grid_spec=pltpu.PrefetchScalarGridSpec(
                num_scalar_prefetch=0,
                grid=(num_tiles,),
                in_specs=[
                    pl.BlockSpec((bm_eff, D), lambda i: (i, 0)),   # streams per tile
                    pl.BlockSpec((D, H), lambda i: (0, 0)),        # VMEM-resident
                    pl.BlockSpec((1, H), lambda i: (0, 0)),
                    pl.BlockSpec((1, H), lambda i: (0, 0)),
                    pl.BlockSpec((1, 1), lambda i: (0, 0)),
                ],
                out_specs=pl.BlockSpec((1, 1, bm_eff), lambda i: (i, 0, 0)),
            ),
            compiler_params=pltpu.CompilerParams(
                dimension_semantics=("parallel",),
            ),
        )(x, w1t, b1r, w2r, b2r)

    return out.reshape(Bp, 1)[:B]


def value_network_ref(ht, params):
    """Pure-JAX reference mirroring the PyTorch forward (eval mode)."""
    w1, b1, w2, b2 = params
    out = ht @ w1.T + b1
    out = jnp.maximum(out, 0.0)        # dropout(p=0.1) is identity in eval mode
    out = out @ w2.T + b2
    return out


if __name__ == "__main__":
    # Config consistent with the module: input_dim=64, hidden_dim=128, output_dim=1.
    B, D, H, O = 16, 64, 128, 1

    key = jax.random.PRNGKey(0)
    ks = jax.random.split(key, 5)
    ht = jax.random.normal(ks[0], (B, D), jnp.float32)
    w1 = jax.random.normal(ks[1], (H, D), jnp.float32) * 0.1
    b1 = jax.random.normal(ks[2], (H,), jnp.float32) * 0.1
    w2 = jax.random.normal(ks[3], (O, H), jnp.float32) * 0.1
    b2 = jax.random.normal(ks[4], (O,), jnp.float32) * 0.1
    params = (w1, b1, w2, b2)

    # 1) f32 path, small batch -> single un-pipelined block (grid-less), exact match.
    prep_f32 = prepare_params(params, matmul_dtype=jnp.float32)
    out = jax.block_until_ready(value_network_forward(ht, prep_f32))
    ref = value_network_ref(ht, params)
    assert out.shape == (B, O)
    assert np.allclose(np.asarray(out), np.asarray(ref), atol=1e-5, rtol=1e-5)

    # 2) bf16-matmul path, larger batch -> tiled "parallel" grid with a padded tail.
    B2 = 272
    ht2 = jax.random.normal(jax.random.PRNGKey(1), (B2, D), jnp.float32)
    prep_bf16 = prepare_params(params, matmul_dtype=jnp.bfloat16)
    out2 = jax.block_until_ready(value_network_forward(ht2, prep_bf16, bm=128))
    ref2 = value_network_ref(ht2, params)
    assert out2.shape == (B2, O)
    assert np.allclose(np.asarray(out2), np.asarray(ref2), atol=5e-2, rtol=5e-2)

    print("KERNEL_OK")
</pallas_src>

<mosaic_0001>
module attributes {stable_mosaic.version = 11 : i64} {
  func.func @_fused_value_kernel(%arg0: memref<16x64xf32, #tpu.memory_space<vmem>>, %arg1: memref<64x128xf32, #tpu.memory_space<vmem>>, %arg2: memref<1x128xf32, #tpu.memory_space<vmem>>, %arg3: memref<1x128xf32, #tpu.memory_space<vmem>>, %arg4: memref<1x1xf32, #tpu.memory_space<vmem>>, %arg5: memref<1x16xf32, #tpu.memory_space<vmem>>) attributes {dimension_semantics = [], scalar_prefetch = 0 : i64, scratch_operands = 0 : i64, tpu.core_type = #tpu.core_type<tc>} {
    %c0 = arith.constant 0 : index
    %c0_0 = arith.constant 0 : index
    %0 = vector.load %arg0[%c0, %c0_0] : memref<16x64xf32, #tpu.memory_space<vmem>>, vector<16x64xf32>
    %c0_1 = arith.constant 0 : index
    %c0_2 = arith.constant 0 : index
    %1 = vector.load %arg1[%c0_1, %c0_2] : memref<64x128xf32, #tpu.memory_space<vmem>>, vector<64x128xf32>
    %cst = arith.constant dense<0.000000e+00> : vector<16x128xf32>
    %2 = tpu.matmul %0, %1, %cst {dimension_numbers = #tpu.dot_dimension_numbers<[1], [0], [0], [1], [0, 0, 1, 1], [], []>} : vector<16x64xf32>, vector<64x128xf32>, vector<16x128xf32> -> vector<16x128xf32>
    %c0_3 = arith.constant 0 : index
    %c0_4 = arith.constant 0 : index
    %3 = vector.load %arg2[%c0_3, %c0_4] : memref<1x128xf32, #tpu.memory_space<vmem>>, vector<1x128xf32>
    %4 = vector.broadcast %3 : vector<1x128xf32> to vector<16x128xf32>
    %5 = arith.addf %2, %4 : vector<16x128xf32>
    %cst_5 = arith.constant 0.000000e+00 : f32
    %6 = vector.broadcast %cst_5 : f32 to vector<16x128xf32>
    %7 = arith.maximumf %5, %6 : vector<16x128xf32>
    %c0_6 = arith.constant 0 : index
    %c0_7 = arith.constant 0 : index
    %8 = vector.load %arg3[%c0_6, %c0_7] : memref<1x128xf32, #tpu.memory_space<vmem>>, vector<1x128xf32>
    %9 = vector.broadcast %8 : vector<1x128xf32> to vector<16x128xf32>
    %10 = arith.mulf %7, %9 : vector<16x128xf32>
    %cst_8 = arith.constant dense<0.000000e+00> : vector<16xf32>
    %11 = vector.multi_reduction <add>, %10, %cst_8 [1] : vector<16x128xf32> to vector<16xf32>
    %12 = vector.shape_cast %11 : vector<16xf32> to vector<1x16xf32>
    %c0_9 = arith.constant 0 : index
    %c0_10 = arith.constant 0 : index
    %13 = vector.load %arg4[%c0_9, %c0_10] : memref<1x1xf32, #tpu.memory_space<vmem>>, vector<1x1xf32>
    %14 = vector.broadcast %13 : vector<1x1xf32> to vector<1x16xf32>
    %15 = arith.addf %12, %14 : vector<1x16xf32>
    %c0_11 = arith.constant 0 : index
    %c0_12 = arith.constant 0 : index
    %16 = vector.load %arg5[%c0_11, %c0_12] : memref<1x16xf32, #tpu.memory_space<vmem>>, vector<1x16xf32>
    tpu.vector_store %arg5[%c0_11, %c0_12], %15 {strides = array<i32>} : memref<1x16xf32, #tpu.memory_space<vmem>>, vector<1x16xf32>,
    return
  }
}

</mosaic_0001>

<llo_original>
// kernel: value_network_forward.1
$region0: #{value_network_forward.1}
  #allocation0 [shape = 'u32[]', space=smem, size = 0x4, offset = 0x4, fixed_abs, tag = 'smem constant byte address 0x4 - core index']
  #allocation1 [shape = 'u32[72,128]{1,0:T(1,128)}', space=vmem, size = 0x9000, scoped, tag = 'internal scratch']
  #allocation2 [shape = 'f32[1,1]{1,0:T(1,128)S(1)}', space=vmem, size = 0x200, scoped, tag = 'scoped memory for value_network_forward.1']
  %s0 = inlined_call_operand.hbm [shape: f32[16,64], index: 0, kind: input, shape index: {}]
  %s1 = inlined_call_operand.hbm [shape: f32[64,128], index: 1, kind: input, shape index: {}]
  %s2 = inlined_call_operand.vmem [shape: f32[1,128], index: 2, kind: input, shape index: {}]
  %s3 = inlined_call_operand.vmem [shape: f32[1,128], index: 3, kind: input, shape index: {}]
  %s4 = inlined_call_operand.<no memory space> [shape: f32[1,1], index: 4, kind: input, shape index: {}]
  %s5 = inlined_call_operand.hbm [shape: f32[1,16], index: 5, kind: output, shape index: {}]
  %s6 = sld [smem:[#allocation0]]
  $region38: #{value_network_forward.1} parent=0
    _
  %s8 = ssub.s32 1, %s6
  %s9 = scalar_select 0, %s8, %s6
  %v10 = vstv %s4
  %11 = vst [vmem:[#allocation2] sm:$0x1] %v10
  $region1: #{value_network_forward.1} parent=0
    #allocation3 [shape = 'u8[8192]{0}', space=vmem, size = 0x2000, scoped, tag = 'input window, operand 0, single buffered']
    #allocation4 [shape = 's32[1]{0}', space=sflag, size = 0x4, scoped, tag = 'scoped memory for value_network_forward.1']
    #allocation5 [shape = 's32[1]{0}', space=sflag, size = 0x4, scoped, tag = 'scoped memory for value_network_forward.1']
    #allocation6 [shape = 'u8[32768]{0}', space=vmem, size = 0x8000, scoped, tag = 'input window, operand 1, single buffered']
    #allocation7 [shape = 's32[1]{0}', space=sflag, size = 0x4, scoped, tag = 'scoped memory for value_network_forward.1']
    #allocation8 [shape = 'u8[512]{0}', space=vmem, size = 0x400, scoped, tag = 'output window, operand 0, single buffered']
    %12 = vsyncpa [#allocation4], 0
    %13 = vsyncpa [#allocation7], 0
    %14 = vsyncpa [#allocation5], 0
    // Predicated region
    $region2: #{value_network_forward.1} parent=1 // pred_check
      _
    $region3: #{value_network_forward.1} parent=1 // pred_check_branch
      %16 = sbr.rel (0) target = $region5
    $region4: #{value_network_forward.1} parent=1 // pred_region
      %18 = vsyncadd [#allocation4], 0
      %s19 = sshll.u32 %s0, 4
      %s20 = int_to_ptr.hbm [resolvable:$true] %s19
      %s21 = sshll.u32 [#allocation3], 4
      %s22 = int_to_ptr.vmem [resolvable:$true] %s21
      %27 = dma.hbm_to_vmem [thread:$0]  %s20, 256, %s22, [#allocation4], 128, 128, 8
    $region5: #{value_network_forward.1} parent=1 // pred_fallthru
      _
    // Predicated region
    $region6: #{value_network_forward.1} parent=1 // pred_check
      _
    $region7: #{value_network_forward.1} parent=1 // pred_check_branch
      %29 = sbr.rel (0) target = $region9
    $region8: #{value_network_forward.1} parent=1 // pred_region
      %31 = vsyncadd [#allocation7], 0
      %s32 = sshll.u32 %s1, 4
      %s33 = int_to_ptr.hbm [resolvable:$true] %s32
      %s34 = sshll.u32 [#allocation6], 4
      %s35 = int_to_ptr.vmem [resolvable:$true] %s34
      %40 = dma.hbm_to_vmem [thread:$0]  %s33, 1024, %s35, [#allocation7], 128, 128, 8
    $region9: #{value_network_forward.1} parent=1 // pred_fallthru
      _
    // Predicated region
    $region10: #{value_network_forward.1} parent=1 // pred_check
      _
    $region11: #{value_network_forward.1} parent=1 // pred_check_branch
      %42 = sbr.rel (0) target = $region13
    $region12: #{value_network_forward.1} parent=1 // pred_region
      _
    $region13: #{value_network_forward.1} parent=1 // pred_fallthru
      _
    // Predicated region
    $region14: #{value_network_forward.1} parent=1 // pred_check
      _
    $region15: #{value_network_forward.1} parent=1 // pred_check_branch
      %44 = sbr.rel (0) target = $region17
    $region16: #{value_network_forward.1} parent=1 // pred_region
      _
    $region17: #{value_network_forward.1} parent=1 // pred_fallthru
      _
    // Predicated region
    $region18: #{value_network_forward.1} parent=1 // pred_check
      _
    $region19: #{value_network_forward.1} parent=1 // pred_check_branch
      %46 = sbr.rel (0) target = $region21
    $region20: #{value_network_forward.1} parent=1 // pred_region
      _
    $region21: #{value_network_forward.1} parent=1 // pred_fallthru
      _
    // Predicated region
    $region22: #{value_network_forward.1} parent=1 // pred_check
      _
    $region23: #{value_network_forward.1} parent=1 // pred_check_branch
      %48 = sbr.rel (0) target = $region25
    $region24: #{value_network_forward.1} parent=1 // pred_region
      %50 = dma.done [#allocation4], 256
    $region25: #{value_network_forward.1} parent=1 // pred_fallthru
      _
    // Predicated region
    $region26: #{value_network_forward.1} parent=1 // pred_check
      _
    $region27: #{value_network_forward.1} parent=1 // pred_check_branch
      %52 = sbr.rel (0) target = $region29
    $region28: #{value_network_forward.1} parent=1 // pred_region
      %54 = dma.done [#allocation7], 1024
    $region29: #{value_network_forward.1} parent=1 // pred_fallthru
      _
    %v55 = vld [vmem:[#allocation3] sm:$0xff]
    %v56 = vld [vmem:[#allocation3 + $0x8] sm:$0xff]
    %v57 = vld [vmem:[#allocation6] sm:$0xff]
    %v58 = vld [vmem:[#allocation6 + $0x8] sm:$0xff]
    %v59 = vld [vmem:[#allocation6 + $0x10] sm:$0xff]
    %v60 = vld [vmem:[#allocation6 + $0x18] sm:$0xff]
    %v61 = vld [vmem:[#allocation6 + $0x20] sm:$0xff]
    %v62 = vld [vmem:[#allocation6 + $0x28] sm:$0xff]
    %v63 = vld [vmem:[#allocation6 + $0x30] sm:$0xff]
    %v64 = vld [vmem:[#allocation6 + $0x38] sm:$0xff]
    %v65 = vld [vmem:[%s2] sm:$0x1]
    %v67 = vperm.slane %v65, 0
    %vm69 = vcmask 523264
    %v71 = vsel %vm69, %v55, 0
    %v74 = vsel %vm69, %v56, 0
    %76 = vmatpush.msra.mxu0 0.0
    %77 = vmatpush.msra.mxu0 0.0
    %78 = vmatpush.msra.mxu0 0.0
    %79 = vmatpush.msra.mxu0 0.0
    %80 = vmatpush.msra.mxu0 0.0
    %81 = vmatpush.msra.mxu0 0.0
    %82 = vmatpush.msra.mxu0 0.0
    %83 = vmatpush.msra.mxu0 0.0
    %84 = vmatpush.msra.mxu0 %v64
    %85 = vmatpush.msra.mxu0 %v63
    %86 = vmatpush.msra.mxu0 %v62
    %87 = vmatpush.msra.mxu0 %v61
    %88 = vmatpush.msra.mxu0 %v60
    %89 = vmatpush.msra.mxu0 %v59
    %90 = vmatpush.msra.mxu0 %v58
    %91 = vmatpush.msra.mxu0 %v57
    %92 = vmatmul.f32.gmra.mxu0 %v71
    %v93 = vpop.f32.mrf.mxu0
    %v94 = vadd.f32 %v67, %v93
    %95 = vmatmul.f32.gmra.mxu0 %v74
    %v96 = vpop.f32.mrf.mxu0
    %v97 = vadd.f32 %v67, %v96
    %98 = vdwg.mxu0
    %v99 = vmax.f32 %v94, 0.0
    %v100 = vmax.f32 %v97, 0.0
    %v101 = vld [vmem:[%s3] sm:$0x1]
    %v103 = vperm.slane %v101, 0
    %v105 = vmul.f32 %v99, %v103
    %v106 = vmul.f32 %v100, %v103
    %107 = vadd.xlane.f32.xlu0 %v105
    %v108 = vpop.xlane.xlu0 %107
    %109 = vadd.xlane.f32.xlu0 %v106
    %v110 = vpop.xlane.xlu0 %109
    %v111 = vld [vmem:[#allocation2] sm:$0x1]
    %113 = vset.pattern.permute.xlu0 0
    %114 = vperm.xlu0 %113, %v111
    %v115 = vpop.permute.xlu0 %114
    %v117 = vperm.slane %v115, 0
    %v118 = vadd.f32 %v108, %v117
    %v119 = vadd.f32 %v110, %v117
    %v122 = vlaneseq
    %v123 = vand.u32 %v122, 127
    %v124 = vperm.slane %v118, %v123
    %v125 = vadd.s32 %v123, 4294967288
    %v126 = vperm.slane %v119, %v125
    %vm127 = vcmask 130112
    %v128 = vsel %vm127, %v126, %v124
    %vm130 = vcmask 122880
    %131 = vst.msk [vmem:[#allocation8] sm:$0x1] %vm130, %v128
    // Predicated region
    $region30: #{value_network_forward.1} parent=1 // pred_check
      _
    $region31: #{value_network_forward.1} parent=1 // pred_check_branch
      %133 = sbr.rel (0) target = $region33
    $region32: #{value_network_forward.1} parent=1 // pred_region
      %135 = vsyncadd [#allocation5], 0
      %s137 = sshll.u32 [#allocation8], 4
      %s138 = int_to_ptr.vmem [resolvable:$true] %s137
      %s139 = sshll.u32 %s5, 4
      %s140 = int_to_ptr.hbm [resolvable:$true] %s139
      %142 = dma.vmem_to_hbm [thread:$0]  %s138, 16, %s140, [#allocation5]
    $region33: #{value_network_forward.1} parent=1 // pred_fallthru
      _
    // Predicated region
    $region34: #{value_network_forward.1} parent=1 // pred_check
      _
    $region35: #{value_network_forward.1} parent=1 // pred_check_branch
      %144 = sbr.rel (0) target = $region37
    $region36: #{value_network_forward.1} parent=1 // pred_region
      %146 = dma.done [#allocation5], 16
    $region37: #{value_network_forward.1} parent=1 // pred_fallthru
      _
    %147 = vsyncpa [#allocation4], 1
    %148 = vsyncpa [#allocation7], 1
    %149 = vsyncpa [#allocation5], 1

</llo_original>
